<compile_context>
chip_gen: v7x
topology: tpu7x:2x2x1
jax: 0.10.0
libtpu: 0.0.40
codegen_flags: <defaults>
</compile_context>

<pallas_src>
import functools

import jax
import jax.numpy as jnp
from jax.experimental import pallas as pl
from jax.experimental.pallas import tpu as pltpu


def _rpn_head_kernel(x_ref, w_ref, b_ref, out_ref):
    """One (batch, spatial-tile) grid step.

    x_ref  : (C, t_hw)     activations (NCHW slice; spatial pixels on lanes)
    w_ref  : (n_pad, C)    fused [obj; trf; zero-pad] 1x1-conv weights
    b_ref  : (1, n_pad)    fused bias (f32)
    out_ref: (t_hw, n_pad) fused head output, already in (pixel, channel)
                           order -> lane-dense store, no post-kernel transpose.
    """
    acc = jnp.dot(w_ref[...], x_ref[...],
                  preferred_element_type=jnp.float32)     # MXU, (n_pad, t_hw)
    acc_t = jnp.transpose(acc, (1, 0))                    # XLU, (t_hw, n_pad)
    out_ref[...] = (acc_t + b_ref[...]).astype(out_ref.dtype)


def _round128_down(x: int) -> int:
    return max(128, (x // 128) * 128)


def _pick_spatial_tile(hw: int, batch: int, c: int, in_itemsize: int,
                       n_pad: int, vmem_budget: int = 12 << 20,
                       target: int = 2048) -> int:
    """VMEM/dtype-aware lane tile over H*W (multiple of 128, or full extent)."""
    if hw <= 128:
        return hw                                 # full extent -> always legal
    # Per-lane VMEM: double-buffered x + out tiles, plus f32 matmul/transpose
    # temporaries.  Weights are tiny and covered by the budget headroom.
    bytes_per_lane = 2 * (c * in_itemsize + n_pad * 4) + 2 * n_pad * 4
    cap = _round128_down(max(128, vmem_budget // bytes_per_lane))
    hw_floor = _round128_down(hw)
    t = min(target, cap, hw_floor)
    if batch == 1 and hw_floor > 512:
        # Keep >= 2 grid steps so both v7x TensorCores get work, but never
        # shrink below 512 lanes (128-lane tiles run at ~29% of HBM roofline).
        half_up = ((-(-hw // 2)) + 127) // 128 * 128
        t = min(t, max(512, half_up))
    t = max(t, min(512, hw_floor, cap))           # stay >= 512 lanes if possible
    if hw % 128 == 0:
        d = t
        while d > 128 and hw % d:
            d -= 128                              # prefer a divisor of HW ...
        if d >= min(512, t):
            t = d                                 # ... to avoid a masked tail tile
    return t


@functools.partial(jax.jit, static_argnames=("spatial_tile",))
def rpn_forward(features_nchw, w_obj, b_obj, w_trf, b_trf, *,
                spatial_tile=None):
    """RPN head forward.

    features_nchw: (B, C, H, W)   (PyTorch conv layout; f32 or bf16)
    w_obj: (A*2, C), b_obj: (A*2,)   -- Conv2d weight with the 1x1 squeezed
    w_trf: (A*4, C), b_trf: (A*4,)

    Returns:
      anchor_objectnesses: (B, H*W*A, 2)
      anchor_transformers: (B, H*W*A, 4)
    """
    B, C, H, W = features_nchw.shape
    HW = H * W
    dt = features_nchw.dtype
    in_itemsize = jnp.dtype(dt).itemsize
    n_obj = w_obj.shape[0]
    n_trf = w_trf.shape[0]
    n_tot = n_obj + n_trf
    num_anchors = n_obj // 2
    n_pad = max(128, -(-n_tot // 128) * 128)      # lane-dense output width

    # Free view: (B, C, H, W) -> (B, C, H*W). No HBM transpose of activations.
    x = features_nchw.reshape(B, C, HW)

    # Fused, zero-padded weight (n_pad, C) and bias (1, n_pad).  Tiny arrays.
    # TODO(synk): fold this once outside the hot path when weights are static.
    w_cat = (jnp.zeros((n_pad, C), dtype=dt)
             .at[:n_obj].set(w_obj.astype(dt))
             .at[n_obj:n_tot].set(w_trf.astype(dt)))
    b_cat = (jnp.zeros((1, n_pad), dtype=jnp.float32)
             .at[0, :n_obj].set(b_obj.astype(jnp.float32))
             .at[0, n_obj:n_tot].set(b_trf.astype(jnp.float32)))

    t_hw = (spatial_tile if spatial_tile is not None
            else _pick_spatial_tile(HW, B, C, in_itemsize, n_pad))
    n_s = pl.cdiv(HW, t_hw)                       # masked tail tile if uneven

    cost = pl.CostEstimate(
        flops=2 * B * HW * C * n_pad,
        transcendentals=0,
        bytes_accessed=(B * C * HW * in_itemsize          # activations read
                        + B * HW * n_pad * in_itemsize    # fused output write
                        + n_pad * C * in_itemsize))       # weights

    out = pl.pallas_call(
        _rpn_head_kernel,
        out_shape=jax.ShapeDtypeStruct((B, HW, n_pad), dt),
        grid_spec=pl.GridSpec(
            grid=(B, n_s),
            in_specs=[
                pl.BlockSpec((None, C, t_hw), lambda b, s: (b, 0, s)),  # x
                pl.BlockSpec((n_pad, C), lambda b, s: (0, 0)),          # weights
                pl.BlockSpec((1, n_pad), lambda b, s: (0, 0)),          # bias
            ],
            out_specs=pl.BlockSpec((None, t_hw, n_pad),
                                   lambda b, s: (b, s, 0)),
        ),
        compiler_params=pltpu.CompilerParams(
            dimension_semantics=("parallel", "parallel"),
            # 32 MiB scoped VMEM: above v5e's 16 MiB default, below the ~48 MiB
            # safe ceiling on v7x (64 MiB physical).
            vmem_limit_bytes=32 * 1024 * 1024),
        cost_estimate=cost,
    )(x, w_cat, b_cat)

    # Output is already permute(0,2,3,1)-flattened, so only the (required by
    # the module contract) narrow-minor-dim channel slice + reshape remain.
    # TODO(synk): downstream consumers that accept (B, HW, A, 2)/(B, HW, A, 4)
    # views of `out` would avoid these narrow-lane re-tiling copies entirely.
    anchor_objectnesses = out[:, :, :n_obj].reshape(B, HW * num_anchors, 2)
    anchor_transformers = out[:, :, n_obj:n_tot].reshape(B, HW * num_anchors, 4)
    return anchor_objectnesses, anchor_transformers


def _reference(features, w_obj, b_obj, w_trf, b_trf):
    """Pure-JAX reference with the same semantics as the PyTorch forward."""
    B, _, H, W = features.shape
    A = w_obj.shape[0] // 2
    x_nhwc = jnp.transpose(features.astype(jnp.float32), (0, 2, 3, 1))
    obj = (jnp.einsum("bhwc,nc->bhwn", x_nhwc, w_obj) + b_obj).reshape(
        B, H * W * A, 2)
    trf = (jnp.einsum("bhwc,nc->bhwn", x_nhwc, w_trf) + b_trf).reshape(
        B, H * W * A, 4)
    return obj, trf


if __name__ == "__main__":
    # Small, deterministic config.
    anchor_ratios = [(1, 2), (1, 1), (2, 1)]
    anchor_sizes = [128, 256, 512]
    num_anchors = len(anchor_ratios) * len(anchor_sizes)   # 9

    key = jax.random.PRNGKey(0)
    k_x, k_wo, k_bo, k_wt, k_bt, k_x2 = jax.random.split(key, 6)

    B, C, H, W = 2, 16, 8, 8
    features = jax.random.normal(k_x, (B, C, H, W), dtype=jnp.float32)

    # Conv2d(C, A*2 / A*4, kernel_size=1) weights with the 1x1 squeezed.
    w_obj = 0.05 * jax.random.normal(k_wo, (num_anchors * 2, C), dtype=jnp.float32)
    b_obj = 0.05 * jax.random.normal(k_bo, (num_anchors * 2,), dtype=jnp.float32)
    w_trf = 0.05 * jax.random.normal(k_wt, (num_anchors * 4, C), dtype=jnp.float32)
    b_trf = 0.05 * jax.random.normal(k_bt, (num_anchors * 4,), dtype=jnp.float32)

    obj, trf = rpn_forward(features, w_obj, b_obj, w_trf, b_trf)
    obj, trf = jax.block_until_ready((obj, trf))
    obj_ref, trf_ref = _reference(features, w_obj, b_obj, w_trf, b_trf)

    assert obj.shape == (B, H * W * num_anchors, 2)
    assert trf.shape == (B, H * W * num_anchors, 4)
    assert jnp.allclose(obj, obj_ref, atol=1e-4, rtol=1e-4)
    assert jnp.allclose(trf, trf_ref, atol=1e-4, rtol=1e-4)

    # Second check: H*W (144) not divisible by the forced 128-lane tile ->
    # exercises the masked tail tile on the writeback path (review concern).
    B2, H2, W2 = 1, 12, 12
    features2 = jax.random.normal(k_x2, (B2, C, H2, W2), dtype=jnp.float32)
    obj2, trf2 = rpn_forward(features2, w_obj, b_obj, w_trf, b_trf,
                             spatial_tile=128)
    obj2, trf2 = jax.block_until_ready((obj2, trf2))
    obj2_ref, trf2_ref = _reference(features2, w_obj, b_obj, w_trf, b_trf)
    assert jnp.allclose(obj2, obj2_ref, atol=1e-4, rtol=1e-4)
    assert jnp.allclose(trf2, trf2_ref, atol=1e-4, rtol=1e-4)

    print("KERNEL_OK")
</pallas_src>

<mosaic_0001>
module attributes {stable_mosaic.version = 11 : i64} {
  func.func @_rpn_head_kernel(%arg0: i32, %arg1: i32, %arg2: memref<1x16x64xf32, #tpu.memory_space<vmem>>, %arg3: memref<128x16xf32, #tpu.memory_space<vmem>>, %arg4: memref<1x128xf32, #tpu.memory_space<vmem>>, %arg5: memref<1x64x128xf32, #tpu.memory_space<vmem>>) attributes {dimension_semantics = [#tpu.dimension_semantics<parallel>, #tpu.dimension_semantics<parallel>], iteration_bounds = array<i64: 2, 1>, scalar_prefetch = 0 : i64, scratch_operands = 0 : i64, tpu.core_type = #tpu.core_type<tc>, window_params = [{transform_indices = @transform_0, window_bounds = array<i64: 1, 16, 64>}, {pipeline_mode = #tpu.pipeline_mode<synchronous>, transform_indices = @transform_1, window_bounds = array<i64: 128, 16>}, {pipeline_mode = #tpu.pipeline_mode<synchronous>, transform_indices = @transform_2, window_bounds = array<i64: 1, 128>}, {transform_indices = @transform_3, window_bounds = array<i64: 1, 64, 128>}]} {
    %c0 = arith.constant 0 : index
    %c0_0 = arith.constant 0 : index
    %0 = vector.load %arg3[%c0, %c0_0] : memref<128x16xf32, #tpu.memory_space<vmem>>, vector<128x16xf32>
    %c0_1 = arith.constant 0 : index
    %c0_2 = arith.constant 0 : index
    %c0_3 = arith.constant 0 : index
    %1 = vector.load %arg2[%c0_1, %c0_2, %c0_3] : memref<1x16x64xf32, #tpu.memory_space<vmem>>, vector<1x16x64xf32>
    %2 = vector.shape_cast %1 : vector<1x16x64xf32> to vector<16x64xf32>
    %cst = arith.constant dense<0.000000e+00> : vector<128x64xf32>
    %3 = tpu.matmul %0, %2, %cst {dimension_numbers = #tpu.dot_dimension_numbers<[1], [0], [0], [1], [0, 0, 1, 1], [], []>} : vector<128x16xf32>, vector<16x64xf32>, vector<128x64xf32> -> vector<128x64xf32>
    %4 = tpu.transpose %3, [1, 0] : vector<128x64xf32> -> vector<64x128xf32>
    %c0_4 = arith.constant 0 : index
    %c0_5 = arith.constant 0 : index
    %5 = vector.load %arg4[%c0_4, %c0_5] : memref<1x128xf32, #tpu.memory_space<vmem>>, vector<1x128xf32>
    %6 = vector.broadcast %5 : vector<1x128xf32> to vector<64x128xf32>
    %7 = arith.addf %4, %6 : vector<64x128xf32>
    %c0_6 = arith.constant 0 : index
    %c0_7 = arith.constant 0 : index
    %c0_8 = arith.constant 0 : index
    %8 = vector.load %arg5[%c0_6, %c0_7, %c0_8] : memref<1x64x128xf32, #tpu.memory_space<vmem>>, vector<1x64x128xf32>
    %9 = vector.shape_cast %8 : vector<1x64x128xf32> to vector<64x128xf32>
    %10 = vector.shape_cast %7 : vector<64x128xf32> to vector<1x64x128xf32>
    tpu.vector_store %arg5[%c0_6, %c0_7, %c0_8], %10 {strides = array<i32>} : memref<1x64x128xf32, #tpu.memory_space<vmem>>, vector<1x64x128xf32>,
    return
  }
  func.func @transform_0(%arg0: i32, %arg1: i32) -> (i32, i32, i32) {
    %c0_i32 = arith.constant 0 : i32
    %c0_i32_0 = arith.constant 0 : i32
    return %arg0, %c0_i32, %arg1 : i32, i32, i32
  }
  func.func @transform_1(%arg0: i32, %arg1: i32) -> (i32, i32) {
    %c0_i32 = arith.constant 0 : i32
    %c0_i32_0 = arith.constant 0 : i32
    %c0_i32_1 = arith.constant 0 : i32
    return %c0_i32, %c0_i32_0 : i32, i32
  }
  func.func @transform_2(%arg0: i32, %arg1: i32) -> (i32, i32) {
    %c0_i32 = arith.constant 0 : i32
    %c0_i32_0 = arith.constant 0 : i32
    %c0_i32_1 = arith.constant 0 : i32
    return %c0_i32, %c0_i32_0 : i32, i32
  }
  func.func @transform_3(%arg0: i32, %arg1: i32) -> (i32, i32, i32) {
    %c0_i32 = arith.constant 0 : i32
    %c0_i32_0 = arith.constant 0 : i32
    return %arg0, %arg1, %c0_i32 : i32, i32, i32
  }
}

</mosaic_0001>

<llo_original>
// kernel: rpn_forward.1
$region0: #{rpn_forward.1}
  #allocation0 [shape = 'u32[]', space=smem, size = 0x4, offset = 0x4, fixed_abs, tag = 'smem constant byte address 0x4 - core index']
  #allocation1 [shape = 'u32[144,128]{1,0:T(1,128)}', space=vmem, size = 0x12000, scoped, tag = 'internal scratch']
  %s0 = inlined_call_operand.vmem [shape: f32[2,16,64], index: 0, kind: input, shape index: {}]
  %s1 = inlined_call_operand.vmem [shape: f32[128,16], index: 1, kind: input, shape index: {}]
  %s2 = inlined_call_operand.vmem [shape: f32[1,128], index: 2, kind: input, shape index: {}]
  %s3 = inlined_call_operand.vmem [shape: f32[2,64,128], index: 3, kind: output, shape index: {}]
  %s4 = sld [smem:[#allocation0]]
  $region45: #{rpn_forward.1} parent=0
    _
  %s6 = ssub.s32 1, %s4
  %s7 = scalar_select 0, %s6, %s4
  loop: start=0, step=1, limit=4
  $region2: #{rpn_forward.1} parent=0 // loop_pre_header
    _
  $region3: #{rpn_forward.1} parent=0 // loop_header
    %s9 = sphi 0, %s13
    %p10 = scmp.ge.s32.totalorder %s9, 4
    %s16 = sphi 0, %s28
    %s17 = sphi 0, %s24
    %s18 = sphi 0, %s16
    %s19 = sphi 0, %s17
    %s20 = sphi 0, %s18
    %s21 = sphi 0, %s19
    %s33 = sphi 0, %s35
    %s36 = sphi 0, %s33
    %s37 = sphi 0, %s36
    %s53 = sphi 0, %s37
    %s57 = sphi 0, %s57
    %s59 = sphi 0, %s57
    %s60 = sphi 0, %s59
    %s74 = sphi 0, %s60
    %s78 = sphi 0, %s78
    %s80 = sphi 0, %s78
    %s81 = sphi 0, %s80
    %s95 = sphi 0, %s81
    %s103 = sphi 0, %s105
    %s106 = sphi 0, %s103
    %s107 = sphi 0, %s106
    %s123 = sphi 0, %s107
  $region4: #{rpn_forward.1} parent=0 // loop_header_branch
    %12 = sbr.rel (%p10) target = $region8
  $region5: #{rpn_forward.1} parent=0 // loop_body
    %s14 = ssub.s32 %s9, 1
    %s15 = ssub.s32 %s9, 2
    %s22 = sadd.s32 1, %s17
    %p23 = scmp.ge.s32.totalorder %s22, 1
    %s24 = scalar_select %p23, 0, %s22
    %s25 = sadd.s32 1, %s16
    %s26 = scalar_select %p23, %s25, %s16
    %p27 = scmp.ge.s32.totalorder %s26, 2
    %s28 = scalar_select %p27, 0, %s26
    %s29 = ssub.s32 %s16, %s28
    %s30 = ssub.s32 %s17, %s24
    %s31 = sor.u32 %s29, %s30
    %p32 = scmp.eq.s32.totalorder %s31, 0
    %s34 = sadd.s32 %s33, 1
    %s35 = scalar_select %p32, %s33, %s34
    %p38 = pneg %p32
    %p39 = scmp.eq.s32.totalorder %s9, 1
    %p40 = por %p38, %p39
    %p41 = scmp.ne.s32.totalorder %s33, %s36
    %p42 = scmp.eq.s32.totalorder %s9, 0
    %p43 = por %p41, %p42
    %p44 = scmp.ne.s32.totalorder %s33, %s36
    %p45 = scmp.eq.s32.totalorder %s14, 1
    %p46 = por %p44, %p45
    %p47 = scmp.ne.s32.totalorder %s36, %s37
    %p48 = scmp.eq.s32.totalorder %s14, 0
    %p49 = por %p47, %p48
    %p50 = scmp.ne.s32.totalorder %s36, %s37
    %p51 = scmp.eq.s32.totalorder %s15, 1
    %p52 = por %p50, %p51
    %p54 = scmp.ne.s32.totalorder %s37, %s53
    %p55 = scmp.eq.s32.totalorder %s15, 0
    %p56 = por %p54, %p55
    %s58 = sadd.s32 %s57, 1
    %p61 = scmp.eq.s32.totalorder %s9, 1
    %p62 = scmp.ne.s32.totalorder %s57, %s59
    %p63 = scmp.eq.s32.totalorder %s9, 0
    %p64 = por %p62, %p63
    %p65 = scmp.ne.s32.totalorder %s57, %s59
    %p66 = scmp.eq.s32.totalorder %s14, 1
    %p67 = por %p65, %p66
    %p68 = scmp.ne.s32.totalorder %s59, %s60
    %p69 = scmp.eq.s32.totalorder %s14, 0
    %p70 = por %p68, %p69
    %p71 = scmp.ne.s32.totalorder %s59, %s60
    %p72 = scmp.eq.s32.totalorder %s15, 1
    %p73 = por %p71, %p72
    %p75 = scmp.ne.s32.totalorder %s60, %s74
    %p76 = scmp.eq.s32.totalorder %s15, 0
    %p77 = por %p75, %p76
    %s79 = sadd.s32 %s78, 1
    %p82 = scmp.eq.s32.totalorder %s9, 1
    %p83 = scmp.ne.s32.totalorder %s78, %s80
    %p84 = scmp.eq.s32.totalorder %s9, 0
    %p85 = por %p83, %p84
    %p86 = scmp.ne.s32.totalorder %s78, %s80
    %p87 = scmp.eq.s32.totalorder %s14, 1
    %p88 = por %p86, %p87
    %p89 = scmp.ne.s32.totalorder %s80, %s81
    %p90 = scmp.eq.s32.totalorder %s14, 0
    %p91 = por %p89, %p90
    %p92 = scmp.ne.s32.totalorder %s80, %s81
    %p93 = scmp.eq.s32.totalorder %s15, 1
    %p94 = por %p92, %p93
    %p96 = scmp.ne.s32.totalorder %s81, %s95
    %p97 = scmp.eq.s32.totalorder %s15, 0
    %p98 = por %p96, %p97
    %s99 = ssub.s32 %s16, %s28
    %s100 = ssub.s32 %s17, %s24
    %s101 = sor.u32 %s99, %s100
    %p102 = scmp.eq.s32.totalorder %s101, 0
    %s104 = sadd.s32 %s103, 1
    %s105 = scalar_select %p102, %s103, %s104
    %p108 = pneg %p102
    %p109 = scmp.eq.s32.totalorder %s9, 1
    %p110 = por %p108, %p109
    %p111 = scmp.ne.s32.totalorder %s103, %s106
    %p112 = scmp.eq.s32.totalorder %s9, 0
    %p113 = por %p111, %p112
    %p114 = scmp.ne.s32.totalorder %s103, %s106
    %p115 = scmp.eq.s32.totalorder %s14, 1
    %p116 = por %p114, %p115
    %p117 = scmp.ne.s32.totalorder %s106, %s107
    %p118 = scmp.eq.s32.totalorder %s14, 0
    %p119 = por %p117, %p118
    %p120 = scmp.ne.s32.totalorder %s106, %s107
    %p121 = scmp.eq.s32.totalorder %s15, 1
    %p122 = por %p120, %p121
    %p124 = scmp.ne.s32.totalorder %s107, %s123
    %p125 = scmp.eq.s32.totalorder %s15, 0
    %p126 = por %p124, %p125
    %p127 = scmp.le.s32.totalorder 1, %s9
    %p128 = scmp.lt.s32.totalorder %s9, 3
    %p129 = pnand %p127, %p128
    %p130 = pneg %p129
    // Predicated region
    $region9: #{rpn_forward.1} parent=5 // pred_check
      _
    $region10: #{rpn_forward.1} parent=5 // pred_check_branch
      %132 = sbr.rel (%p129) target = $region12
    $region11: #{rpn_forward.1} parent=5 // pred_region
      %s133 = ssub.s32 %s9, 1
      // Predicated region
      $region13: #{rpn_forward.1} parent=11 // pred_check
        %p134 = pneg %p70
      $region14: #{rpn_forward.1} parent=11 // pred_check_branch
        %136 = sbr.rel (%p134) target = $region16
      $region15: #{rpn_forward.1} parent=11 // pred_region
        _
      $region16: #{rpn_forward.1} parent=11 // pred_fallthru
        _
      // Predicated region
      $region17: #{rpn_forward.1} parent=11 // pred_check
        %p137 = pneg %p91
      $region18: #{rpn_forward.1} parent=11 // pred_check_branch
        %139 = sbr.rel (%p137) target = $region20
      $region19: #{rpn_forward.1} parent=11 // pred_region
        _
      $region20: #{rpn_forward.1} parent=11 // pred_fallthru
        _
    $region12: #{rpn_forward.1} parent=5 // pred_fallthru
      _
    %p140 = scmp.lt.s32.totalorder %s9, 2
    // Predicated region
    $region21: #{rpn_forward.1} parent=5 // pred_check
      %p141 = pneg %p140
    $region22: #{rpn_forward.1} parent=5 // pred_check_branch
      %143 = sbr.rel (%p141) target = $region24
    $region23: #{rpn_forward.1} parent=5 // pred_region
      // Predicated region
      $region25: #{rpn_forward.1} parent=23 // pred_check
        %p144 = pneg %p43
      $region26: #{rpn_forward.1} parent=23 // pred_check_branch
        %146 = sbr.rel (%p144) target = $region28
      $region27: #{rpn_forward.1} parent=23 // pred_region
        %p147 = scmp.lt.s32.totalorder %s16, 1
        %s148 = scalar_select %p147, %s16, 1
        %p149 = scmp.lt.s32.totalorder %s17, 0
        %s150 = scalar_select %p149, %s17, 0
        %s151 = smul.addr %s148, 2
        %s152 = sadd.s32 %s150, %s151
        %s153 = smul.addr %s152, 8
        %s154 = scalar_lea.vmem %s0, %s153
      $region28: #{rpn_forward.1} parent=23 // pred_fallthru
        _
    $region24: #{rpn_forward.1} parent=5 // pred_fallthru
      _
    %p155 = scmp.le.s32.totalorder 1, %s9
    %p156 = scmp.lt.s32.totalorder %s9, 3
    %p157 = pnand %p155, %p156
    %p158 = pneg %p157
    // Predicated region
    $region29: #{rpn_forward.1} parent=5 // pred_check
      _
    $region30: #{rpn_forward.1} parent=5 // pred_check_branch
      %160 = sbr.rel (%p157) target = $region32
    $region31: #{rpn_forward.1} parent=5 // pred_region
      %s161 = ssub.s32 %s9, 1
      %p162 = scmp.lt.s32.totalorder %s18, 1
      %s163 = scalar_select %p162, %s18, 1
      %p164 = scmp.lt.s32.totalorder %s19, 0
      %s165 = scalar_select %p164, %s19, 0
      %s166 = smul.addr %s163, 2
      %s167 = sadd.s32 %s165, %s166
      %s168 = smul.addr %s167, 8
      %s169 = scalar_lea.vmem %s0, %s168
      %p170 = pneg %p49
      %p171 = pneg %p46
      %p172 = pneg %p70
      %p173 = pneg %p67
      %p174 = pneg %p91
      %p175 = pneg %p88
      %p176 = pneg %p119
      %p177 = pneg %p116
      %s178 = smul.u32 8, %s19
      %p179 = scmp.lt.s32.totalorder %s18, 1
      %s180 = scalar_select %p179, %s18, 1
      %p181 = scmp.lt.s32.totalorder %s178, 7
      %s182 = scalar_select %p181, %s178, 7
      %s183 = smul.addr %s180, 8
      %s184 = sadd.s32 %s182, %s183
      %s185 = smul.addr %s184, 8
      %s186 = scalar_lea.vmem %s3, %s185
      %p187 = scmp.lt.s32.totalorder %s18, 1
      %s188 = scalar_select %p187, %s18, 1
      %p189 = scmp.lt.s32.totalorder %s19, 0
      %s190 = scalar_select %p189, %s19, 0
      %s191 = smul.addr %s188, 2
      %s192 = sadd.s32 %s190, %s191
      %s193 = smul.addr %s192, 8
      %s194 = scalar_lea.vmem %s0, %s193
      %s195 = smul.u32 8, %s19
      %p196 = scmp.lt.s32.totalorder %s18, 1
      %s197 = scalar_select %p196, %s18, 1
      %p198 = scmp.lt.s32.totalorder %s195, 7
      %s199 = scalar_select %p198, %s195, 7
      %s200 = smul.addr %s197, 8
      %s201 = sadd.s32 %s199, %s200
      %s202 = smul.addr %s201, 8
      %s203 = scalar_lea.vmem %s3, %s202
      %s204 = smul.u32 8, %s19
      %v205 = vld [vmem:[%s1] sm:$0xff]
      %v206 = vld [vmem:[%s1 + $0x8] sm:$0xff]
      %v207 = vld [vmem:[%s1 + $0x10] sm:$0xff]
      %v208 = vld [vmem:[%s1 + $0x18] sm:$0xff]
      %v209 = vld [vmem:[%s1 + $0x20] sm:$0xff]
      %v210 = vld [vmem:[%s1 + $0x28] sm:$0xff]
      %v211 = vld [vmem:[%s1 + $0x30] sm:$0xff]
      %v212 = vld [vmem:[%s1 + $0x38] sm:$0xff]
      %v213 = vld [vmem:[%s1 + $0x40] sm:$0xff]
      %v214 = vld [vmem:[%s1 + $0x48] sm:$0xff]
      %v215 = vld [vmem:[%s1 + $0x50] sm:$0xff]
      %v216 = vld [vmem:[%s1 + $0x58] sm:$0xff]
      %v217 = vld [vmem:[%s1 + $0x60] sm:$0xff]
      %v218 = vld [vmem:[%s1 + $0x68] sm:$0xff]
      %v219 = vld [vmem:[%s1 + $0x70] sm:$0xff]
      %v220 = vld [vmem:[%s1 + $0x78] sm:$0xff]
      %v221 = vld [vmem:[%s194] sm:$0xff]
      %v222 = vld [vmem:[%s194 + $0x8] sm:$0xff]
      %vm223 = vcmask 130048
      %v225 = vsel %vm223, %v205, 0
      %v228 = vsel %vm223, %v206, 0
      %v231 = vsel %vm223, %v207, 0
      %v234 = vsel %vm223, %v208, 0
      %v237 = vsel %vm223, %v209, 0
      %v240 = vsel %vm223, %v210, 0
      %v243 = vsel %vm223, %v211, 0
      %v246 = vsel %vm223, %v212, 0
      %v249 = vsel %vm223, %v213, 0
      %v252 = vsel %vm223, %v214, 0
      %v255 = vsel %vm223, %v215, 0
      %v258 = vsel %vm223, %v216, 0
      %v261 = vsel %vm223, %v217, 0
      %v264 = vsel %vm223, %v218, 0
      %v267 = vsel %vm223, %v219, 0
      %v270 = vsel %vm223, %v220, 0
      %272 = vmatprep.subr.mxu0 0.0
      %273 = vmatpush1.msra.mxu0 %v221
      %274 = vmatprep.subr.mxu0 0.0
      %275 = vmatpush1.msra.mxu0 %v222
      %276 = vmatprep.subr.mxu0 0.0
      %277 = vmatpush1.msra.mxu0 0.0
      %278 = vmatprep.subr.mxu0 0.0
      %279 = vmatpush1.msra.mxu0 0.0
      %280 = vmatprep.subr.mxu0 0.0
      %281 = vmatpush1.msra.mxu0 0.0
      %282 = vmatprep.subr.mxu0 0.0
      %283 = vmatpush1.msra.mxu0 0.0
      %284 = vmatprep.subr.mxu0 0.0
      %285 = vmatpush1.msra.mxu0 0.0
      %286 = vmatprep.subr.mxu0 0.0
      %287 = vmatpush1.msra.mxu0 0.0
      %288 = vmatprep.subr.mxu0 0.0
      %289 = vmatpush1.msra.mxu0 0.0
      %290 = vmatprep.subr.mxu0 0.0
      %291 = vmatpush1.msra.mxu0 0.0
      %292 = vmatprep.subr.mxu0 0.0
      %293 = vmatpush1.msra.mxu0 0.0
      %294 = vmatprep.subr.mxu0 0.0
      %295 = vmatpush1.msra.mxu0 0.0
      %296 = vmatprep.subr.mxu0 0.0
      %297 = vmatpush1.msra.mxu0 0.0
      %298 = vmatprep.subr.mxu0 0.0
      %299 = vmatpush1.msra.mxu0 0.0
      %300 = vmatprep.subr.mxu0 0.0
      %301 = vmatpush1.msra.mxu0 0.0
      %302 = vmatprep.subr.mxu0 0.0
      %303 = vmatpush1.msra.mxu0 0.0
      %304 = vmatprep.subr.mxu0 0.0
      %305 = vmatpush1.msra.mxu0 0.0
      %306 = vmatprep.subr.mxu0 0.0
      %307 = vmatpush1.msra.mxu0 0.0
      %308 = vmatprep.subr.mxu0 0.0
      %309 = vmatpush1.msra.mxu0 0.0
      %310 = vmatprep.subr.mxu0 0.0
      %311 = vmatpush1.msra.mxu0 0.0
      %312 = vmatprep.subr.mxu0 0.0
      %313 = vmatpush1.msra.mxu0 0.0
      %314 = vmatprep.subr.mxu0 0.0
      %315 = vmatpush1.msra.mxu0 0.0
      %316 = vmatprep.subr.mxu0 0.0
      %317 = vmatpush1.msra.mxu0 0.0
      %318 = vmatprep.subr.mxu0 0.0
      %319 = vmatpush1.msra.mxu0 0.0
      %320 = vmatprep.subr.mxu0 0.0
      %321 = vmatpush1.msra.mxu0 0.0
      %322 = vmatprep.subr.mxu0 0.0
      %323 = vmatpush1.msra.mxu0 0.0
      %324 = vmatprep.subr.mxu0 0.0
      %325 = vmatpush1.msra.mxu0 0.0
      %326 = vmatprep.subr.mxu0 0.0
      %327 = vmatpush1.msra.mxu0 0.0
      %328 = vmatprep.subr.mxu0 0.0
      %329 = vmatpush1.msra.mxu0 0.0
      %330 = vmatprep.subr.mxu0 0.0
      %331 = vmatpush1.msra.mxu0 0.0
      %332 = vmatprep.subr.mxu0 0.0
      %333 = vmatpush1.msra.mxu0 0.0
      %334 = vmatprep.subr.mxu0 0.0
      %335 = vmatpush1.msra.mxu0 0.0
      %336 = vmatprep.mubr.f32.mxu0 0.0
      %337 = vmatmul.mubr.f32.gmra.mrb[0].mxu0 %v225
      %v338 = vpop.f32.mrb[0].mxu0
      %v339 = vadd.f32 0.0, %v338
      %v340 = vpop.f32.mrb[0].mxu0
      %341 = vmatprep.mubr.f32.mxu0 0.0
      %342 = vmatmul.mubr.f32.gmra.mrb[0].mxu0 %v228
      %v343 = vpop.f32.mrb[0].mxu0
      %v344 = vadd.f32 0.0, %v343
      %v345 = vpop.f32.mrb[0].mxu0
      %346 = vmatprep.mubr.f32.mxu0 0.0
      %347 = vmatmul.mubr.f32.gmra.mrb[0].mxu0 %v231
      %v348 = vpop.f32.mrb[0].mxu0
      %v349 = vadd.f32 0.0, %v348
      %v350 = vpop.f32.mrb[0].mxu0
      %351 = vmatprep.mubr.f32.mxu0 0.0
      %352 = vmatmul.mubr.f32.gmra.mrb[0].mxu0 %v234
      %v353 = vpop.f32.mrb[0].mxu0
      %v354 = vadd.f32 0.0, %v353
      %v355 = vpop.f32.mrb[0].mxu0
      %356 = vmatprep.mubr.f32.mxu0 0.0
      %357 = vmatmul.mubr.f32.gmra.mrb[0].mxu0 %v237
      %v358 = vpop.f32.mrb[0].mxu0
      %v359 = vadd.f32 0.0, %v358
      %v360 = vpop.f32.mrb[0].mxu0
      %361 = vmatprep.mubr.f32.mxu0 0.0
      %362 = vmatmul.mubr.f32.gmra.mrb[0].mxu0 %v240
      %v363 = vpop.f32.mrb[0].mxu0
      %v364 = vadd.f32 0.0, %v363
      %v365 = vpop.f32.mrb[0].mxu0
      %366 = vmatprep.mubr.f32.mxu0 0.0
      %367 = vmatmul.mubr.f32.gmra.mrb[0].mxu0 %v243
      %v368 = vpop.f32.mrb[0].mxu0
      %v369 = vadd.f32 0.0, %v368
      %v370 = vpop.f32.mrb[0].mxu0
      %371 = vmatprep.mubr.f32.mxu0 0.0
      %372 = vmatmul.mubr.f32.gmra.mrb[0].mxu0 %v246
      %v373 = vpop.f32.mrb[0].mxu0
      %v374 = vadd.f32 0.0, %v373
      %v375 = vpop.f32.mrb[0].mxu0
      %376 = vmatprep.mubr.f32.mxu0 0.0
      %377 = vmatmul.mubr.f32.gmra.mrb[0].mxu0 %v249
      %v378 = vpop.f32.mrb[0].mxu0
      %v379 = vadd.f32 0.0, %v378
      %v380 = vpop.f32.mrb[0].mxu0
      %381 = vmatprep.mubr.f32.mxu0 0.0
      %382 = vmatmul.mubr.f32.gmra.mrb[0].mxu0 %v252
      %v383 = vpop.f32.mrb[0].mxu0
      %v384 = vadd.f32 0.0, %v383
      %v385 = vpop.f32.mrb[0].mxu0
      %386 = vmatprep.mubr.f32.mxu0 0.0
      %387 = vmatmul.mubr.f32.gmra.mrb[0].mxu0 %v255
      %v388 = vpop.f32.mrb[0].mxu0
      %v389 = vadd.f32 0.0, %v388
      %v390 = vpop.f32.mrb[0].mxu0
      %391 = vmatprep.mubr.f32.mxu0 0.0
      %392 = vmatmul.mubr.f32.gmra.mrb[0].mxu0 %v258
      %v393 = vpop.f32.mrb[0].mxu0
      %v394 = vadd.f32 0.0, %v393
      %v395 = vpop.f32.mrb[0].mxu0
      %396 = vmatprep.mubr.f32.mxu0 0.0
      %397 = vmatmul.mubr.f32.gmra.mrb[0].mxu0 %v261
      %v398 = vpop.f32.mrb[0].mxu0
      %v399 = vadd.f32 0.0, %v398
      %v400 = vpop.f32.mrb[0].mxu0
      %401 = vmatprep.mubr.f32.mxu0 0.0
      %402 = vmatmul.mubr.f32.gmra.mrb[0].mxu0 %v264
      %v403 = vpop.f32.mrb[0].mxu0
      %v404 = vadd.f32 0.0, %v403
      %v405 = vpop.f32.mrb[0].mxu0
      %406 = vmatprep.mubr.f32.mxu0 0.0
      %407 = vmatmul.mubr.f32.gmra.mrb[0].mxu0 %v267
      %v408 = vpop.f32.mrb[0].mxu0
      %v409 = vadd.f32 0.0, %v408
      %v410 = vpop.f32.mrb[0].mxu0
      %411 = vmatprep.mubr.f32.mxu0 0.0
      %412 = vmatmul.mubr.f32.gmra.mrb[0].mxu0 %v270
      %v413 = vpop.f32.mrb[0].mxu0
      %v414 = vadd.f32 0.0, %v413
      %v415 = vpop.f32.mrb[0].mxu0
      %416 = vdwg.mxu0
      %417 = vxpose.xlu0.b32.start [1/16] %v339, 128
      %418 = vxpose.xlu0.b32.cont [2/16] %v344, 128
      %419 = vxpose.xlu0.b32.cont [3/16] %v349, 128
      %420 = vxpose.xlu0.b32.cont [4/16] %v354, 128
      %421 = vxpose.xlu0.b32.cont [5/16] %v359, 128
      %422 = vxpose.xlu0.b32.cont [6/16] %v364, 128
      %423 = vxpose.xlu0.b32.cont [7/16] %v369, 128
      %424 = vxpose.xlu0.b32.cont [8/16] %v374, 128
      %425 = vxpose.xlu0.b32.cont [9/16] %v379, 128
      %426 = vxpose.xlu0.b32.cont [10/16] %v384, 128
      %427 = vxpose.xlu0.b32.cont [11/16] %v389, 128
      %428 = vxpose.xlu0.b32.cont [12/16] %v394, 128
      %429 = vxpose.xlu0.b32.cont [13/16] %v399, 128
      %430 = vxpose.xlu0.b32.cont [14/16] %v404, 128
      %431 = vxpose.xlu0.b32.cont [15/16] %v409, 128
      %432 = vxpose.xlu0.b32.end [16/16] %v414, 128
      %v433 = vpop.trf.xlu0
      %v434 = vpop.trf.xlu0
      %v435 = vpop.trf.xlu0
      %v436 = vpop.trf.xlu0
      %v437 = vpop.trf.xlu0
      %v438 = vpop.trf.xlu0
      %v439 = vpop.trf.xlu0
      %v440 = vpop.trf.xlu0
      %v441 = vpop.trf.xlu0
      %v442 = vpop.trf.xlu0
      %v443 = vpop.trf.xlu0
      %v444 = vpop.trf.xlu0
      %v445 = vpop.trf.xlu0
      %v446 = vpop.trf.xlu0
      %v447 = vpop.trf.xlu0
      %v448 = vpop.trf.xlu0
      %v449 = vld [vmem:[%s2] sm:$0x1]
      %v451 = vlaneseq
      %v452 = vshrl.u32 %v451, 7
      %v453 = vsub.s32 0, %v452
      %v454 = vrot.slane %v449, %v453
      %v456 = vadd.f32 %v433, %v454
      %v457 = vadd.f32 %v434, %v454
      %v458 = vadd.f32 %v435, %v454
      %v459 = vadd.f32 %v436, %v454
      %v460 = vadd.f32 %v437, %v454
      %v461 = vadd.f32 %v438, %v454
      %v462 = vadd.f32 %v439, %v454
      %v463 = vadd.f32 %v440, %v454
      %464 = vst [vmem:[%s203] sm:$0xff] %v456
      %465 = vst [vmem:[%s203 + $0x8] sm:$0xff] %v457
      %466 = vst [vmem:[%s203 + $0x10] sm:$0xff] %v458
      %467 = vst [vmem:[%s203 + $0x18] sm:$0xff] %v459
      %468 = vst [vmem:[%s203 + $0x20] sm:$0xff] %v460
      %469 = vst [vmem:[%s203 + $0x28] sm:$0xff] %v461
      %470 = vst [vmem:[%s203 + $0x30] sm:$0xff] %v462
      %471 = vst [vmem:[%s203 + $0x38] sm:$0xff] %v463
      %s472 = smul.u32 8, %s19
      %p473 = scmp.lt.s32.totalorder %s18, 1
      %s474 = scalar_select %p473, %s18, 1
      %p475 = scmp.lt.s32.totalorder %s472, 7
      %s476 = scalar_select %p475, %s472, 7
      %s477 = smul.addr %s474, 8
      %s478 = sadd.s32 %s476, %s477
      %s479 = smul.addr %s478, 8
      %s480 = scalar_lea.vmem %s3, %s479
      // Predicated region
      $region33: #{rpn_forward.1} parent=31 // pred_check
        %p481 = pneg %p116
      $region34: #{rpn_forward.1} parent=31 // pred_check_branch
        %483 = sbr.rel (%p481) target = $region36
      $region35: #{rpn_forward.1} parent=31 // pred_region
        %s484 = smul.u32 8, %s19
      $region36: #{rpn_forward.1} parent=31 // pred_fallthru
        _
    $region32: #{rpn_forward.1} parent=5 // pred_fallthru
      _
    %p485 = scmp.le.s32.totalorder 2, %s9
    // Predicated region
    $region37: #{rpn_forward.1} parent=5 // pred_check
      %p486 = pneg %p485
    $region38: #{rpn_forward.1} parent=5 // pred_check_branch
      %488 = sbr.rel (%p486) target = $region40
    $region39: #{rpn_forward.1} parent=5 // pred_region
      %s489 = ssub.s32 %s9, 2
      // Predicated region
      $region41: #{rpn_forward.1} parent=39 // pred_check
        %p490 = pneg %p122
      $region42: #{rpn_forward.1} parent=39 // pred_check_branch
        %492 = sbr.rel (%p490) target = $region44
      $region43: #{rpn_forward.1} parent=39 // pred_region
        %s493 = smul.u32 8, %s21
        %p494 = scmp.lt.s32.totalorder %s20, 1
        %s495 = scalar_select %p494, %s20, 1
        %p496 = scmp.lt.s32.totalorder %s493, 7
        %s497 = scalar_select %p496, %s493, 7
        %s498 = smul.addr %s495, 8
        %s499 = sadd.s32 %s497, %s498
        %s500 = smul.addr %s499, 8
        %s501 = scalar_lea.vmem %s3, %s500
      $region44: #{rpn_forward.1} parent=39 // pred_fallthru
        _
    $region40: #{rpn_forward.1} parent=5 // pred_fallthru
      _
  $region6: #{rpn_forward.1} parent=0 // loop_footer
    %s13 = sadd.s32 1, %s9
  $region7: #{rpn_forward.1} parent=0 // loop_footer_branch
    %8 = sbr.rel target = $region3
  $region8: #{rpn_forward.1} parent=0 // loop_exit
    _

</llo_original>
